<compile_context>
chip_gen: v6e
topology: v6e:2x2x1
jax: 0.10.0
libtpu: 0.0.40
codegen_flags: <defaults>
</compile_context>

<pallas_src>
import functools

import jax
import jax.numpy as jnp
from jax import lax
from jax.experimental import pallas as pl
from jax.experimental.pallas import tpu as pltpu

_LANES = 128
_DEFAULT_BLOCK_ROWS = 2048  # (2048, 128) f32 = 1 MiB per input block


def _round_up(x, m):
    return (x + m - 1) // m * m


def _ranking_loss_kernel(x1_ref, x2_ref, out_ref, acc_ref, *,
                         margin, n_pairs, block_rows, lanes, mask_tail):
    pid = pl.program_id(0)

    @pl.when(pid == 0)
    def _init():
        acc_ref[...] = jnp.zeros_like(acc_ref)

    # Full lane-dense tiles: pure VPU elementwise work, no masked width-1 slices.
    x1 = x1_ref[...]                      # output1 (even-index / better image)
    x2 = x2_ref[...]                      # output2 (odd-index image)
    hinge = jnp.maximum(x1 - x2 + margin, 0.0)

    if mask_tail:
        # Only real pairs contribute to the sum (padding lives in the last block).
        row = lax.broadcasted_iota(jnp.int32, hinge.shape, 0)
        col = lax.broadcasted_iota(jnp.int32, hinge.shape, 1)
        idx = (pid * block_rows + row) * lanes + col
        hinge = jnp.where(idx < n_pairs, hinge, 0.0)

    # Lane-parallel running partial sum (sublane reduce per block).
    acc_ref[...] += jnp.sum(hinge, axis=0, keepdims=True)

    @pl.when(pid == pl.num_programs(0) - 1)
    def _finalize():
        total = jnp.sum(acc_ref[...])
        out_ref[...] = (total * (1.0 / n_pairs)).reshape(1, 1)


def ranking_loss_ref(image_p_batch, margin=0.5):
    """Pure-JAX reference (also used for tiny batches where a kernel launch loses)."""
    scores = jnp.asarray(image_p_batch, dtype=jnp.float32).reshape(-1)
    o1 = scores[0::2]
    o2 = scores[1::2]
    return jnp.mean(jnp.maximum(-(o2 - o1) + margin, 0.0))


def ranking_loss(image_p_batch, _dmos=None, *, margin=0.5,
                 block_rows=None, use_pallas=None):
    """JAX/Pallas equivalent of RankingLoss.forward.

    image_p_batch: (batch,) or (batch, 1) float scores, batch must be even.
    _dmos: ignored placeholder (like `_` in the PyTorch module).
    use_pallas: True -> always use the Pallas kernel, False -> pure jnp,
                None -> auto (pure jnp for tiny batches, kernel otherwise).
    Returns a scalar float32 loss.
    """
    scores = jnp.asarray(image_p_batch, dtype=jnp.float32).reshape(-1)
    batch = scores.shape[0]
    assert batch % 2 == 0, "batch must be even (adjacent image pairs)"
    n_pairs = batch // 2

    if use_pallas is None:
        # Launch overhead dwarfs ~n FLOPs of work for typical IQA batch sizes.
        use_pallas = n_pairs >= 1024
    if not use_pallas:
        return ranking_loss_ref(scores, margin=margin)

    # De-interleave in the wrapper (cheap XLA layout plumbing) -> lane-dense input.
    pairs = scores.reshape(n_pairs, 2)
    x1 = pairs[:, 0]                      # output1: even-index scores
    x2 = pairs[:, 1]                      # output2: odd-index scores

    rows = pl.cdiv(n_pairs, _LANES)
    if block_rows is None:
        block_rows = _DEFAULT_BLOCK_ROWS
    block_rows = max(8, _round_up(min(block_rows, _round_up(rows, 8)), 8))
    rows_padded = _round_up(rows, block_rows)
    padded_pairs = rows_padded * _LANES
    n_blocks = rows_padded // block_rows

    x1 = jnp.pad(x1, (0, padded_pairs - n_pairs)).reshape(rows_padded, _LANES)
    x2 = jnp.pad(x2, (0, padded_pairs - n_pairs)).reshape(rows_padded, _LANES)

    kernel = functools.partial(
        _ranking_loss_kernel,
        margin=float(margin),
        n_pairs=n_pairs,
        block_rows=block_rows,
        lanes=_LANES,
        mask_tail=(padded_pairs != n_pairs),
    )

    out = pl.pallas_call(
        kernel,
        out_shape=jax.ShapeDtypeStruct((1, 1), jnp.float32),
        grid_spec=pltpu.PrefetchScalarGridSpec(
            num_scalar_prefetch=0,
            grid=(n_blocks,),
            in_specs=[
                pl.BlockSpec((block_rows, _LANES), lambda i: (i, 0)),
                pl.BlockSpec((block_rows, _LANES), lambda i: (i, 0)),
            ],
            out_specs=pl.BlockSpec((1, 1), lambda i: (0, 0)),
            scratch_shapes=[pltpu.VMEM((1, _LANES), jnp.float32)],
        ),
        compiler_params=pltpu.CompilerParams(
            dimension_semantics=("arbitrary",),  # reduction axis (output accumulator)
        ),
    )(x1, x2)
    return out[0, 0]

# TODO(synk): RankingLoss.accuracy (eval-only helper, not part of forward) is not ported.


if __name__ == "__main__":
    key = jax.random.PRNGKey(0)
    k1, k2, k3 = jax.random.split(key, 3)
    margin = 0.5

    # Case 1: typical small IQA batch, (batch, 1) per-image scores, DMOS placeholder.
    x_small = jax.random.normal(k1, (8, 1), dtype=jnp.float32)
    dmos_placeholder = jnp.zeros((8,), dtype=jnp.float32)  # unused, like `_`
    loss_small = jax.block_until_ready(
        ranking_loss(x_small, dmos_placeholder, margin=margin, use_pallas=True))
    ref_small = ranking_loss_ref(x_small, margin=margin)
    assert jnp.allclose(loss_small, ref_small, atol=1e-6, rtol=1e-6), (loss_small, ref_small)

    # Case 2: n_pairs (=307) not a multiple of 128 -> exercises the tail mask.
    x_tail = jax.random.normal(k2, (614,), dtype=jnp.float32)
    loss_tail = jax.block_until_ready(
        ranking_loss(x_tail, margin=margin, use_pallas=True))
    ref_tail = ranking_loss_ref(x_tail, margin=margin)
    assert jnp.allclose(loss_tail, ref_tail, atol=1e-5, rtol=1e-5), (loss_tail, ref_tail)

    # Case 3: multi-block grid + running accumulator (small block_rows override).
    x_grid = jax.random.normal(k3, (2 * 1030,), dtype=jnp.float32)
    loss_grid = jax.block_until_ready(
        ranking_loss(x_grid, margin=margin, use_pallas=True, block_rows=8))
    ref_grid = ranking_loss_ref(x_grid, margin=margin)
    assert jnp.allclose(loss_grid, ref_grid, atol=1e-5, rtol=1e-5), (loss_grid, ref_grid)

    print("KERNEL_OK")
</pallas_src>

<mosaic_0001>
module attributes {stable_mosaic.version = 11 : i64} {
  func.func @_ranking_loss_kernel(%arg0: i32, %arg1: memref<8x128xf32, #tpu.memory_space<vmem>>, %arg2: memref<8x128xf32, #tpu.memory_space<vmem>>, %arg3: memref<1x1xf32, #tpu.memory_space<vmem>>, %arg4: memref<1x128xf32, #tpu.memory_space<vmem>>) attributes {dimension_semantics = [#tpu.dimension_semantics<arbitrary>], iteration_bounds = array<i64: 1>, scalar_prefetch = 0 : i64, scratch_operands = 1 : i64, tpu.core_type = #tpu.core_type<tc>, window_params = [{transform_indices = @transform_0, window_bounds = array<i64: 8, 128>}, {transform_indices = @transform_1, window_bounds = array<i64: 8, 128>}, {pipeline_mode = #tpu.pipeline_mode<synchronous>, transform_indices = @transform_2, window_bounds = array<i64: 1, 1>}]} {
    %c0_i32 = arith.constant 0 : i32
    %0 = arith.cmpi eq, %arg0, %c0_i32 : i32
    %1 = arith.extui %0 : i1 to i32
    %c0_i32_0 = arith.constant 0 : i32
    %2 = arith.cmpi ne, %1, %c0_i32_0 : i32
    scf.if %2 {
      %cst_13 = arith.constant 0.000000e+00 : f32
      %30 = vector.broadcast %cst_13 : f32 to vector<1x128xf32>
      %c0_14 = arith.constant 0 : index
      %c0_15 = arith.constant 0 : index
      %31 = vector.load %arg4[%c0_14, %c0_15] : memref<1x128xf32, #tpu.memory_space<vmem>>, vector<1x128xf32>
      tpu.vector_store %arg4[%c0_14, %c0_15], %30 {strides = array<i32>} : memref<1x128xf32, #tpu.memory_space<vmem>>, vector<1x128xf32>,
    } else {
    }
    %c0 = arith.constant 0 : index
    %c0_1 = arith.constant 0 : index
    %3 = vector.load %arg1[%c0, %c0_1] : memref<8x128xf32, #tpu.memory_space<vmem>>, vector<8x128xf32>
    %c0_2 = arith.constant 0 : index
    %c0_3 = arith.constant 0 : index
    %4 = vector.load %arg2[%c0_2, %c0_3] : memref<8x128xf32, #tpu.memory_space<vmem>>, vector<8x128xf32>
    %5 = arith.subf %3, %4 : vector<8x128xf32>
    %cst = arith.constant 5.000000e-01 : f32
    %6 = vector.broadcast %cst : f32 to vector<8x128xf32>
    %7 = arith.addf %5, %6 : vector<8x128xf32>
    %cst_4 = arith.constant 0.000000e+00 : f32
    %8 = vector.broadcast %cst_4 : f32 to vector<8x128xf32>
    %9 = arith.maximumf %7, %8 : vector<8x128xf32>
    %10 = tpu.iota {dimensions = array<i32: 0>} : vector<8x128xi32>
    %11 = tpu.iota {dimensions = array<i32: 1>} : vector<8x128xi32>
    %c8_i32 = arith.constant 8 : i32
    %12 = arith.muli %arg0, %c8_i32 : i32
    %13 = vector.broadcast %12 : i32 to vector<8x128xi32>
    %14 = arith.addi %13, %10 : vector<8x128xi32>
    %c128_i32 = arith.constant 128 : i32
    %15 = vector.broadcast %c128_i32 : i32 to vector<8x128xi32>
    %16 = arith.muli %14, %15 : vector<8x128xi32>
    %17 = arith.addi %16, %11 : vector<8x128xi32>
    %c4_i32 = arith.constant 4 : i32
    %18 = vector.broadcast %c4_i32 : i32 to vector<8x128xi32>
    %19 = arith.cmpi slt, %17, %18 : vector<8x128xi32>
    %cst_5 = arith.constant 0.000000e+00 : f32
    %20 = vector.broadcast %cst_5 : f32 to vector<8x128xf32>
    %21 = arith.select %19, %9, %20 : vector<8x128xi1>, vector<8x128xf32>
    %c0_6 = arith.constant 0 : index
    %c0_7 = arith.constant 0 : index
    %22 = vector.load %arg4[%c0_6, %c0_7] : memref<1x128xf32, #tpu.memory_space<vmem>>, vector<1x128xf32>
    %cst_8 = arith.constant dense<0.000000e+00> : vector<128xf32>
    %23 = vector.multi_reduction <add>, %21, %cst_8 [0] : vector<8x128xf32> to vector<128xf32>
    %24 = vector.shape_cast %23 : vector<128xf32> to vector<1x128xf32>
    %25 = arith.addf %22, %24 : vector<1x128xf32>
    %c0_9 = arith.constant 0 : index
    %c0_10 = arith.constant 0 : index
    %26 = vector.load %arg4[%c0_9, %c0_10] : memref<1x128xf32, #tpu.memory_space<vmem>>, vector<1x128xf32>
    tpu.vector_store %arg4[%c0_9, %c0_10], %25 {strides = array<i32>} : memref<1x128xf32, #tpu.memory_space<vmem>>, vector<1x128xf32>,
    %c0_i32_11 = arith.constant 0 : i32
    %27 = arith.cmpi eq, %arg0, %c0_i32_11 : i32
    %28 = arith.extui %27 : i1 to i32
    %c0_i32_12 = arith.constant 0 : i32
    %29 = arith.cmpi ne, %28, %c0_i32_12 : i32
    scf.if %29 {
      %c0_13 = arith.constant 0 : index
      %c0_14 = arith.constant 0 : index
      %30 = vector.load %arg4[%c0_13, %c0_14] : memref<1x128xf32, #tpu.memory_space<vmem>>, vector<1x128xf32>
      %31 = vector.shape_cast %30 : vector<1x128xf32> to vector<1x1x128xf32>
      %cst_15 = arith.constant dense<0.000000e+00> : vector<1xf32>
      %32 = vector.multi_reduction <add>, %31, %cst_15 [1, 2] : vector<1x1x128xf32> to vector<1xf32>
      %33 = vector.shape_cast %32 : vector<1xf32> to vector<1x1x1xf32>
      %34 = vector.extract %33[0, 0, 0] : f32 from vector<1x1x1xf32>
      %cst_16 = arith.constant 2.500000e-01 : f32
      %35 = arith.mulf %34, %cst_16 : f32
      %36 = vector.broadcast %35 : f32 to vector<1x1xf32>
      %c0_17 = arith.constant 0 : index
      %c0_18 = arith.constant 0 : index
      %37 = vector.load %arg3[%c0_17, %c0_18] : memref<1x1xf32, #tpu.memory_space<vmem>>, vector<1x1xf32>
      tpu.vector_store %arg3[%c0_17, %c0_18], %36 {strides = array<i32>} : memref<1x1xf32, #tpu.memory_space<vmem>>, vector<1x1xf32>,
    } else {
    }
    return
  }
  func.func @transform_0(%arg0: i32) -> (i32, i32) {
    %c0_i32 = arith.constant 0 : i32
    %c0_i32_0 = arith.constant 0 : i32
    return %arg0, %c0_i32 : i32, i32
  }
  func.func @transform_1(%arg0: i32) -> (i32, i32) {
    %c0_i32 = arith.constant 0 : i32
    %c0_i32_0 = arith.constant 0 : i32
    return %arg0, %c0_i32 : i32, i32
  }
  func.func @transform_2(%arg0: i32) -> (i32, i32) {
    %c0_i32 = arith.constant 0 : i32
    %c0_i32_0 = arith.constant 0 : i32
    %c0_i32_1 = arith.constant 0 : i32
    return %c0_i32, %c0_i32_0 : i32, i32
  }
}

</mosaic_0001>

<llo_original>
// kernel: tpu_custom_call.1
$region0: #{tpu_custom_call.1}
  #allocation0 [shape = 'u32[]', space=smem, size = 0x4, offset = 0x4, fixed_abs, tag = 'smem constant byte address 0x4 - core index']
  #allocation1 [shape = 'u32[144,128]{1,0:T(1,128)}', space=vmem, size = 0x12000, scoped, tag = 'internal scratch']
  #allocation2 [shape = 'f32[1,128]{1,0:T(1,128)}', space=vmem, size = 0x200, scoped, tag = 'scratch operand']
  %s0 = inlined_call_operand.hbm [shape: f32[8,128], index: 0, kind: input, shape index: {}]
  %s1 = inlined_call_operand.hbm [shape: f32[8,128], index: 1, kind: input, shape index: {}]
  %s2 = inlined_call_operand.hbm [shape: f32[1,1], index: 2, kind: output, shape index: {}]
  %s3 = sld [smem:[#allocation0]]
  $region34: #{tpu_custom_call.1} parent=0
    _
  %s5 = ssub.s32 1, %s3
  %s6 = scalar_select 0, %s5, %s3
  $region1: #{tpu_custom_call.1} parent=0
    #allocation3 [shape = 'u8[4096]{0}', space=vmem, size = 0x1000, scoped, tag = 'input window, operand 0, single buffered']
    #allocation4 [shape = 's32[1]{0}', space=sflag, size = 0x4, scoped, tag = 'scoped memory for tpu_custom_call.1']
    #allocation5 [shape = 's32[1]{0}', space=sflag, size = 0x4, scoped, tag = 'scoped memory for tpu_custom_call.1']
    #allocation6 [shape = 'u8[4096]{0}', space=vmem, size = 0x1000, scoped, tag = 'input window, operand 1, single buffered']
    #allocation7 [shape = 's32[1]{0}', space=sflag, size = 0x4, scoped, tag = 'scoped memory for tpu_custom_call.1']
    #allocation8 [shape = 'u8[512]{0}', space=vmem, size = 0x400, scoped, tag = 'output window, operand 0, single buffered']
    %7 = vsyncpa [#allocation4], 0
    %8 = vsyncpa [#allocation7], 0
    %9 = vsyncpa [#allocation5], 0
    // Predicated region
    $region2: #{tpu_custom_call.1} parent=1 // pred_check
      _
    $region3: #{tpu_custom_call.1} parent=1 // pred_check_branch
      %11 = sbr.rel (0) target = $region5
    $region4: #{tpu_custom_call.1} parent=1 // pred_region
      %s13 = ssub.s32 128, 128
      %14 = vsyncadd [#allocation4], %s13
      %s16 = sshll.u32 [#allocation3], 4
      %s17 = int_to_ptr.vmem [resolvable:$true] %s16
      %19 = dma.hbm_to_vmem [thread:$0]  %s0, 128, %s17, [#allocation4]
    $region5: #{tpu_custom_call.1} parent=1 // pred_fallthru
      _
    // Predicated region
    $region6: #{tpu_custom_call.1} parent=1 // pred_check
      _
    $region7: #{tpu_custom_call.1} parent=1 // pred_check_branch
      %21 = sbr.rel (0) target = $region9
    $region8: #{tpu_custom_call.1} parent=1 // pred_region
      %s23 = ssub.s32 128, 128
      %24 = vsyncadd [#allocation7], %s23
      %s26 = sshll.u32 [#allocation6], 4
      %s27 = int_to_ptr.vmem [resolvable:$true] %s26
      %29 = dma.hbm_to_vmem [thread:$0]  %s1, 128, %s27, [#allocation7]
    $region9: #{tpu_custom_call.1} parent=1 // pred_fallthru
      _
    // Predicated region
    $region10: #{tpu_custom_call.1} parent=1 // pred_check
      _
    $region11: #{tpu_custom_call.1} parent=1 // pred_check_branch
      %31 = sbr.rel (0) target = $region13
    $region12: #{tpu_custom_call.1} parent=1 // pred_region
      %32 = dma.done [#allocation4], 128
    $region13: #{tpu_custom_call.1} parent=1 // pred_fallthru
      _
    // Predicated region
    $region14: #{tpu_custom_call.1} parent=1 // pred_check
      _
    $region15: #{tpu_custom_call.1} parent=1 // pred_check_branch
      %34 = sbr.rel (0) target = $region17
    $region16: #{tpu_custom_call.1} parent=1 // pred_region
      %35 = dma.done [#allocation7], 128
    $region17: #{tpu_custom_call.1} parent=1 // pred_fallthru
      _
    %p36 = scmp.eq.s32.totalorder 0, 0
    // Predicated region
    $region18: #{tpu_custom_call.1} parent=1 // pred_check
      %p37 = pneg %p36
    $region19: #{tpu_custom_call.1} parent=1 // pred_check_branch
      %39 = sbr.rel (%p37) target = $region21
    $region20: #{tpu_custom_call.1} parent=1 // pred_region
      %40 = vst [vmem:[#allocation2] sm:$0x1] 0.0
    $region21: #{tpu_custom_call.1} parent=1 // pred_fallthru
      _
    %v41 = vld [vmem:[#allocation3] sm:$0xff]
    %v42 = vld [vmem:[#allocation6] sm:$0xff]
    %v43 = vsub.f32 %v41, %v42
    %v44 = vadd.f32 %v43, 0.5
    %v45 = vmax.f32 %v44, 0.0
    %v46 = vlaneseq
    %v47 = vshrl.u32 %v46, 7
    %v48 = vlaneseq
    %v49 = vand.u32 %v48, 127
    %s50 = smul.u32 0, 8
    %v51 = vstv %s50
    %v52 = vadd.s32 %v51, %v47
    %v53 = vmul.u32 %v52, 128
    %v54 = vadd.s32 %v53, %v49
    %vm55 = vcmp.lt.s32.totalorder %v54, 4
    %v56 = vsel %vm55, %v45, 0.0
    %v57 = vld [vmem:[#allocation2] sm:$0x1]
    %v58 = vrot.slane %v56, 4
    %v59 = vadd.f32 %v56, %v58
    %v60 = vrot.slane %v59, 2
    %v61 = vadd.f32 %v59, %v60
    %v62 = vrot.slane %v61, 1
    %v63 = vadd.f32 %v61, %v62
    %v64 = vadd.f32 %v57, %v63
    %65 = vst [vmem:[#allocation2] sm:$0x1] %v64
    // Predicated region
    $region22: #{tpu_custom_call.1} parent=1 // pred_check
      %p66 = pneg %p36
    $region23: #{tpu_custom_call.1} parent=1 // pred_check_branch
      %68 = sbr.rel (%p66) target = $region25
    $region24: #{tpu_custom_call.1} parent=1 // pred_region
      %v69 = vld [vmem:[#allocation2] sm:$0x1]
      %vm70 = vcmask 1040384
      %v71 = vsel %vm70, %v69, 0.0
      %72 = vadd.xlane.f32.xlu0 %v71
      %v73 = vpop.xlane.xlu0 %72
      %v74 = vrot.slane %v73, 4
      %v75 = vadd.f32 %v73, %v74
      %v76 = vrot.slane %v75, 2
      %v77 = vadd.f32 %v75, %v76
      %v78 = vrot.slane %v77, 1
      %v79 = vadd.f32 %v77, %v78
      %s80 = vtos %v79
      %s81 = smul.f32 %s80, 0.25
      %v82 = vstv %s81
      %vm83 = vcmask 0
      %84 = vst.msk [vmem:[#allocation8] sm:$0x1] %vm83, %v82
    $region25: #{tpu_custom_call.1} parent=1 // pred_fallthru
      _
    // Predicated region
    $region26: #{tpu_custom_call.1} parent=1 // pred_check
      _
    $region27: #{tpu_custom_call.1} parent=1 // pred_check_branch
      %86 = sbr.rel (0) target = $region29
    $region28: #{tpu_custom_call.1} parent=1 // pred_region
      %s88 = ssub.s32 16, 16
      %89 = vsyncadd [#allocation5], %s88
      %s91 = sshll.u32 [#allocation8], 4
      %s92 = int_to_ptr.vmem [resolvable:$true] %s91
      %94 = dma.vmem_to_hbm [thread:$0]  %s92, 16, %s2, [#allocation5]
    $region29: #{tpu_custom_call.1} parent=1 // pred_fallthru
      _
    // Predicated region
    $region30: #{tpu_custom_call.1} parent=1 // pred_check
      _
    $region31: #{tpu_custom_call.1} parent=1 // pred_check_branch
      %96 = sbr.rel (0) target = $region33
    $region32: #{tpu_custom_call.1} parent=1 // pred_region
      %97 = dma.done [#allocation5], 16
    $region33: #{tpu_custom_call.1} parent=1 // pred_fallthru
      _
    %98 = vsyncpa [#allocation4], 1
    %99 = vsyncpa [#allocation7], 1
    %100 = vsyncpa [#allocation5], 1

</llo_original>
